<compile_context>
chip_gen: v7x
topology: tpu7x:2x2x1
jax: 0.10.0
libtpu: 0.0.40
codegen_flags: <defaults>
</compile_context>

<pallas_src>
import jax
import jax.numpy as jnp
from jax import lax
from jax.experimental import pallas as pl
from jax.experimental.pallas import tpu as pltpu


def _round_up(x, m):
    return ((x + m - 1) // m) * m


# ---------------------------------------------------------------------------
# Prologue kernel: fused Q/K/V projection for all heads over one tile of
# source rows.  Bias added in f32, cast to bf16 ONCE (halves the resident K/V
# activation footprint downstream).
# ---------------------------------------------------------------------------
def _qkv_proj_kernel(nf_ref, wT_ref, b_ref, q_ref, kv_ref):
    hd = q_ref.shape[-1]                                            # H * Dp
    qkv = (jnp.dot(nf_ref[...], wT_ref[...],
                   preferred_element_type=jnp.float32) + b_ref[...])
    q_ref[...] = qkv[:, :hd].astype(q_ref.dtype)                    # [TB, H*Dp]
    kv_ref[...] = qkv[:, hd:].astype(kv_ref.dtype)                  # [TB, 2*H*Dp]


# ---------------------------------------------------------------------------
# Attention kernel: one grid step handles a block of destination rows against
# all (padded) source nodes, which stay resident in VMEM along with weights.
# ---------------------------------------------------------------------------
def _attn_kernel(q_ref, kv_ref, mask_ref, woT_ref, bo_ref, out_ref, w_ref,
                 wv_sc):
    tq, dp = out_ref.shape
    np_pad = w_ref.shape[-1]
    n_heads = q_ref.shape[-1] // dp

    q_all = q_ref[...]             # [TQ, H*Dp]   bf16 (dst tile)
    kv_all = kv_ref[...]           # [Np, 2*H*Dp] bf16 (resident, K heads | V heads)
    mask = mask_ref[...]           # [1, Np] f32: 0 on real source cols, -1e9 on pad

    dn = (((1,), (1,)), ((), ()))  # contract last dims of both (no k.T / XLU)
    w_acc = jnp.zeros((tq, np_pad), jnp.float32)

    for h in range(n_heads):       # H is small: static unroll
        q = q_all[:, h * dp:(h + 1) * dp]                           # [TQ, Dp]
        k = kv_all[:, h * dp:(h + 1) * dp]                          # [Np, Dp]
        v = kv_all[:, (n_heads + h) * dp:(n_heads + h + 1) * dp]    # [Np, Dp]

        s = lax.dot_general(q, k, dn,
                            preferred_element_type=jnp.float32) + mask  # [TQ, Np]

        # Softmax over incoming edges (source axis), in f32.
        m = jnp.max(s, axis=-1, keepdims=True)
        e = jnp.exp(s - m)
        denom = jnp.sum(e, axis=-1, keepdims=True)
        w = e * pl.reciprocal(denom, approx=True)                   # [TQ, Np]

        wv = jnp.dot(w.astype(jnp.bfloat16), v,
                     preferred_element_type=jnp.float32)            # [TQ, Dp]
        wv_sc[:, h * dp:(h + 1) * dp] = wv.astype(jnp.bfloat16)
        w_acc = w_acc + w

    # 'cat' merge: a single deep (K = H*Dp) output matmul instead of H shallow ones.
    out = (jnp.dot(wv_sc[...], woT_ref[...],
                   preferred_element_type=jnp.float32) + bo_ref[...])
    out_ref[...] = out.astype(out_ref.dtype)
    w_ref[...] = (w_acc * (1.0 / n_heads)).astype(w_ref.dtype)


# ---------------------------------------------------------------------------
# Wrapper: padding, parameter packing, the two pallas_calls, un-padding.
# ---------------------------------------------------------------------------
def multi_head_attn(node_feature, params, block_rows=None):
    """node_feature: [N, D] f32; params: per-head nn.Linear weights (init_params).
    Returns (out_nf [N, D] f32, weight [N, N] f32)."""
    n, d = node_feature.shape
    h = params["wq"].shape[0]

    dp = _round_up(d, 128)                 # lane-dense per-head width
    if block_rows is None:
        # Modest destination tile: fits under v7x's 64 MiB VMEM; sweep 512/1024
        # on v5e/v6e (128 MiB VMEM) for large graphs.
        block_rows = 256
    block_rows = _round_up(block_rows, 128)
    np_pad = _round_up(n, 128)
    block_rows = min(block_rows, np_pad)
    np_pad = _round_up(np_pad, block_rows)  # N not divisible -> pad, stay pipelined
    grid = (np_pad // block_rows,)

    # --- pad inputs / pack weights (in production do this once at load time) ---
    nf_p = (jnp.zeros((np_pad, dp), jnp.float32)
            .at[:n, :d].set(node_feature).astype(jnp.bfloat16))
    # Additive softmax mask over the (padded) source axis.
    col_mask = jnp.where(jnp.arange(np_pad) < n, 0.0, -1e9)
    col_mask = col_mask.astype(jnp.float32).reshape(1, np_pad)

    # Packed projection weight^T [Dp, 3*H*Dp]: column blocks [Q_0..Q_{H-1},
    # K_0..K_{H-1}, V_0..V_{H-1}], each padded to Dp lanes (zeros elsewhere).
    wT = jnp.zeros((dp, 3 * h * dp), jnp.float32)
    b = jnp.zeros((1, 3 * h * dp), jnp.float32)
    for kind, (wn, bn) in enumerate((("wq", "bq"), ("wk", "bk"), ("wv", "bv"))):
        for hh in range(h):
            c = (kind * h + hh) * dp
            wT = wT.at[:d, c:c + d].set(params[wn][hh].T)
            b = b.at[0, c:c + d].set(params[bn][hh])
    woT = jnp.zeros((h * dp, dp), jnp.float32)
    for hh in range(h):
        woT = woT.at[hh * dp:hh * dp + d, :d].set(
            params["wo"][:, hh * d:(hh + 1) * d].T)
    bo = jnp.zeros((1, dp), jnp.float32).at[0, :d].set(params["bo"])
    wT = wT.astype(jnp.bfloat16)
    woT = woT.astype(jnp.bfloat16)

    cparams = pltpu.CompilerParams(
        dimension_semantics=("parallel",),          # dst-row blocks independent
        vmem_limit_bytes=64 * 1024 * 1024)
    # TODO(synk): for very large graphs, single-buffer the constant-index
    # resident inputs (pipeline_mode=pl.Buffered(1)) and add flash-style
    # source-axis tiling (online softmax) once Np*2*H*Dp bf16 no longer fits
    # VMEM (hits v7x's 64 MiB first).

    # ---- 1) fused Q/K/V projection: runs ONCE over all nodes ---------------
    q_all, kv_all = pl.pallas_call(
        _qkv_proj_kernel,
        out_shape=(jax.ShapeDtypeStruct((np_pad, h * dp), jnp.bfloat16),
                   jax.ShapeDtypeStruct((np_pad, 2 * h * dp), jnp.bfloat16)),
        grid=grid,
        in_specs=[
            pl.BlockSpec((block_rows, dp), lambda i: (i, 0)),        # nf tile
            pl.BlockSpec((dp, 3 * h * dp), lambda i: (0, 0)),        # packed W^T
            pl.BlockSpec((1, 3 * h * dp), lambda i: (0, 0)),         # packed bias
        ],
        out_specs=(pl.BlockSpec((block_rows, h * dp), lambda i: (i, 0)),
                   pl.BlockSpec((block_rows, 2 * h * dp), lambda i: (i, 0))),
        compiler_params=cparams,
    )(nf_p, wT, b)

    # ---- 2) attention over destination-row blocks ---------------------------
    out_p, w_p = pl.pallas_call(
        _attn_kernel,
        out_shape=(jax.ShapeDtypeStruct((np_pad, dp), jnp.float32),
                   # TODO(synk): emit the attention weights in bf16 / make them
                   # optional if the [N,N] writeback dominates HBM traffic.
                   jax.ShapeDtypeStruct((np_pad, np_pad), jnp.float32)),
        grid=grid,
        in_specs=[
            pl.BlockSpec((block_rows, h * dp), lambda i: (i, 0)),    # Q tile
            pl.BlockSpec((np_pad, 2 * h * dp), lambda i: (0, 0)),    # K|V resident
            pl.BlockSpec((1, np_pad), lambda i: (0, 0)),             # softmax mask
            pl.BlockSpec((h * dp, dp), lambda i: (0, 0)),            # Wo^T
            pl.BlockSpec((1, dp), lambda i: (0, 0)),                 # bo
        ],
        out_specs=(pl.BlockSpec((block_rows, dp), lambda i: (i, 0)),
                   pl.BlockSpec((block_rows, np_pad), lambda i: (i, 0))),
        scratch_shapes=[pltpu.VMEM((block_rows, h * dp), jnp.bfloat16)],
        compiler_params=cparams,
    )(q_all, kv_all, col_mask, woT, bo)

    return out_p[:n, :d], w_p[:n, :n]


# ---------------------------------------------------------------------------
# Deterministic parameter init mirroring nn.Linear shapes:
#   K/Q/V[h]: weight [D, D], bias [D];  O: weight [D, H*D], bias [D]
# ---------------------------------------------------------------------------
def init_params(key, model_dim, num_heads):
    d, h = model_dim, num_heads
    ks = jax.random.split(key, 8)
    bound = 1.0 / (d ** 0.5)

    def unif(k, shape):
        return jax.random.uniform(k, shape, jnp.float32, -bound, bound)

    return {
        "wq": unif(ks[0], (h, d, d)), "bq": unif(ks[1], (h, d)),
        "wk": unif(ks[2], (h, d, d)), "bk": unif(ks[3], (h, d)),
        "wv": unif(ks[4], (h, d, d)), "bv": unif(ks[5], (h, d)),
        "wo": unif(ks[6], (d, h * d)), "bo": unif(ks[7], (d,)),
    }


def reference(node_feature, params):
    """Pure-JAX reference mirroring the PyTorch module on a fully connected
    graph, with the same mixed-precision policy as the kernel (bf16 MXU
    operands, f32 accumulation, f32 softmax).  merge == 'cat'."""
    h = params["wq"].shape[0]
    n, d = node_feature.shape
    nf = node_feature.astype(jnp.bfloat16)
    woT = params["wo"].T
    out = jnp.zeros((n, d), jnp.float32)
    w_sum = jnp.zeros((n, n), jnp.float32)
    for hh in range(h):
        k = jnp.dot(nf, params["wk"][hh].T.astype(jnp.bfloat16),
                    preferred_element_type=jnp.float32) + params["bk"][hh]
        q = jnp.dot(nf, params["wq"][hh].T.astype(jnp.bfloat16),
                    preferred_element_type=jnp.float32) + params["bq"][hh]
        v = jnp.dot(nf, params["wv"][hh].T.astype(jnp.bfloat16),
                    preferred_element_type=jnp.float32) + params["bv"][hh]
        s = jnp.dot(q.astype(jnp.bfloat16), k.astype(jnp.bfloat16).T,
                    preferred_element_type=jnp.float32)
        w = jax.nn.softmax(s, axis=-1)
        wv = jnp.dot(w.astype(jnp.bfloat16), v.astype(jnp.bfloat16),
                     preferred_element_type=jnp.float32)
        out = out + jnp.dot(wv.astype(jnp.bfloat16),
                            woT[hh * d:(hh + 1) * d].astype(jnp.bfloat16),
                            preferred_element_type=jnp.float32)
        w_sum = w_sum + w
    return out + params["bo"], w_sum / h


if __name__ == "__main__":
    # TODO(synk): merge='mean' variant of the module is not implemented
    # (module default is 'cat'); DGL graph bookkeeping is modeled as a fully
    # connected graph.
    N, D, H = 8, 32, 2      # 8 nodes (fully connected graph), model_dim=32, 2 heads

    key = jax.random.PRNGKey(0)
    k_nf, k_par = jax.random.split(key)
    node_feature = jax.random.normal(k_nf, (N, D), jnp.float32)
    params = init_params(k_par, D, H)

    out_nf, weight = multi_head_attn(node_feature, params)
    jax.block_until_ready((out_nf, weight))

    ref_out, ref_w = reference(node_feature, params)
    assert out_nf.shape == (N, D) and weight.shape == (N, N)
    # Tolerances reflect the bf16-matmul / approximate-reciprocal policy
    # (both kernel and reference use bf16 MXU operands with f32 accumulation).
    assert jnp.allclose(out_nf, ref_out, atol=5e-3, rtol=5e-3), (
        float(jnp.max(jnp.abs(out_nf - ref_out))))
    assert jnp.allclose(weight, ref_w, atol=5e-3, rtol=5e-3), (
        float(jnp.max(jnp.abs(weight - ref_w))))
    # Attention weights are row-stochastic over incoming edges (approx recip).
    assert jnp.allclose(jnp.sum(weight, axis=-1), 1.0, atol=3e-3)

    print("KERNEL_OK")
</pallas_src>

<mosaic_0001>
module attributes {stable_mosaic.version = 11 : i64} {
  func.func @_qkv_proj_kernel(%arg0: i32, %arg1: memref<128x128xbf16, #tpu.memory_space<vmem>>, %arg2: memref<128x768xbf16, #tpu.memory_space<vmem>>, %arg3: memref<1x768xf32, #tpu.memory_space<vmem>>, %arg4: memref<128x256xbf16, #tpu.memory_space<vmem>>, %arg5: memref<128x512xbf16, #tpu.memory_space<vmem>>) attributes {dimension_semantics = [#tpu.dimension_semantics<parallel>], iteration_bounds = array<i64: 1>, scalar_prefetch = 0 : i64, scratch_operands = 0 : i64, tpu.core_type = #tpu.core_type<tc>, window_params = [{transform_indices = @transform_0, window_bounds = array<i64: 128, 128>}, {pipeline_mode = #tpu.pipeline_mode<synchronous>, transform_indices = @transform_1, window_bounds = array<i64: 128, 768>}, {pipeline_mode = #tpu.pipeline_mode<synchronous>, transform_indices = @transform_2, window_bounds = array<i64: 1, 768>}, {transform_indices = @transform_3, window_bounds = array<i64: 128, 256>}, {transform_indices = @transform_4, window_bounds = array<i64: 128, 512>}]} {
    %c0 = arith.constant 0 : index
    %c0_0 = arith.constant 0 : index
    %0 = vector.load %arg1[%c0, %c0_0] : memref<128x128xbf16, #tpu.memory_space<vmem>>, vector<128x128xbf16>
    %c0_1 = arith.constant 0 : index
    %c0_2 = arith.constant 0 : index
    %1 = vector.load %arg2[%c0_1, %c0_2] : memref<128x768xbf16, #tpu.memory_space<vmem>>, vector<128x768xbf16>
    %cst = arith.constant dense<0.000000e+00> : vector<128x768xf32>
    %2 = tpu.matmul %0, %1, %cst {dimension_numbers = #tpu.dot_dimension_numbers<[1], [0], [0], [1], [0, 0, 1, 1], [], []>} : vector<128x128xbf16>, vector<128x768xbf16>, vector<128x768xf32> -> vector<128x768xf32>
    %c0_3 = arith.constant 0 : index
    %c0_4 = arith.constant 0 : index
    %3 = vector.load %arg3[%c0_3, %c0_4] : memref<1x768xf32, #tpu.memory_space<vmem>>, vector<1x768xf32>
    %4 = vector.broadcast %3 : vector<1x768xf32> to vector<128x768xf32>
    %5 = arith.addf %2, %4 : vector<128x768xf32>
    %6 = vector.extract_strided_slice %5 {offsets = [0, 0], sizes = [128, 256], strides = [1, 1]} : vector<128x768xf32> to vector<128x256xf32>
    %7 = arith.truncf %6 : vector<128x256xf32> to vector<128x256xbf16>
    %c0_5 = arith.constant 0 : index
    %c0_6 = arith.constant 0 : index
    %8 = vector.load %arg4[%c0_5, %c0_6] : memref<128x256xbf16, #tpu.memory_space<vmem>>, vector<128x256xbf16>
    tpu.vector_store %arg4[%c0_5, %c0_6], %7 {strides = array<i32>} : memref<128x256xbf16, #tpu.memory_space<vmem>>, vector<128x256xbf16>,
    %9 = vector.extract_strided_slice %5 {offsets = [0, 256], sizes = [128, 512], strides = [1, 1]} : vector<128x768xf32> to vector<128x512xf32>
    %10 = arith.truncf %9 : vector<128x512xf32> to vector<128x512xbf16>
    %c0_7 = arith.constant 0 : index
    %c0_8 = arith.constant 0 : index
    %11 = vector.load %arg5[%c0_7, %c0_8] : memref<128x512xbf16, #tpu.memory_space<vmem>>, vector<128x512xbf16>
    tpu.vector_store %arg5[%c0_7, %c0_8], %10 {strides = array<i32>} : memref<128x512xbf16, #tpu.memory_space<vmem>>, vector<128x512xbf16>,
    return
  }
  func.func @transform_0(%arg0: i32) -> (i32, i32) {
    %c0_i32 = arith.constant 0 : i32
    %c0_i32_0 = arith.constant 0 : i32
    return %arg0, %c0_i32 : i32, i32
  }
  func.func @transform_1(%arg0: i32) -> (i32, i32) {
    %c0_i32 = arith.constant 0 : i32
    %c0_i32_0 = arith.constant 0 : i32
    %c0_i32_1 = arith.constant 0 : i32
    return %c0_i32, %c0_i32_0 : i32, i32
  }
  func.func @transform_2(%arg0: i32) -> (i32, i32) {
    %c0_i32 = arith.constant 0 : i32
    %c0_i32_0 = arith.constant 0 : i32
    %c0_i32_1 = arith.constant 0 : i32
    return %c0_i32, %c0_i32_0 : i32, i32
  }
  func.func @transform_3(%arg0: i32) -> (i32, i32) {
    %c0_i32 = arith.constant 0 : i32
    %c0_i32_0 = arith.constant 0 : i32
    return %arg0, %c0_i32 : i32, i32
  }
  func.func @transform_4(%arg0: i32) -> (i32, i32) {
    %c0_i32 = arith.constant 0 : i32
    %c0_i32_0 = arith.constant 0 : i32
    return %arg0, %c0_i32 : i32, i32
  }
}

</mosaic_0001>

<llo_original>
// kernel: tpu_custom_call.1
$region0: #{tpu_custom_call.1}
  #allocation0 [shape = 'u32[]', space=smem, size = 0x4, offset = 0x4, fixed_abs, tag = 'smem constant byte address 0x4 - core index']
  #allocation1 [shape = 'u32[144,128]{1,0:T(1,128)}', space=vmem, size = 0x12000, scoped, tag = 'internal scratch']
  %s0 = inlined_call_operand.hbm [shape: bf16[128,128], index: 0, kind: input, shape index: {}]
  %s1 = inlined_call_operand.hbm [shape: bf16[128,768], index: 1, kind: input, shape index: {}]
  %s2 = inlined_call_operand.hbm [shape: f32[1,768], index: 2, kind: input, shape index: {}]
  %s3 = inlined_call_operand.hbm [shape: bf16[128,256], index: 3, kind: output, shape index: {0}]
  %s4 = inlined_call_operand.hbm [shape: bf16[128,512], index: 4, kind: output, shape index: {1}]
  %5 = xla_tuple %s3, %s4
  %s6 = sld [smem:[#allocation0]]
  $region42: #{tpu_custom_call.1} parent=0
    _
  %s8 = ssub.s32 1, %s6
  %s9 = scalar_select 0, %s8, %s6
  $region1: #{tpu_custom_call.1} parent=0
    #allocation2 [shape = 'u8[32768]{0}', space=vmem, size = 0x8000, scoped, tag = 'input window, operand 0, single buffered']
    #allocation3 [shape = 's32[1]{0}', space=sflag, size = 0x4, scoped, tag = 'scoped memory for tpu_custom_call.1']
    #allocation4 [shape = 's32[1]{0}', space=sflag, size = 0x4, scoped, tag = 'scoped memory for tpu_custom_call.1']
    #allocation5 [shape = 'u8[196608]{0}', space=vmem, size = 0x30000, scoped, tag = 'input window, operand 1, single buffered']
    #allocation6 [shape = 's32[1]{0}', space=sflag, size = 0x4, scoped, tag = 'scoped memory for tpu_custom_call.1']
    #allocation7 [shape = 'u8[3072]{0}', space=vmem, size = 0xc00, scoped, tag = 'input window, operand 2, single buffered']
    #allocation8 [shape = 'u8[65536]{0}', space=vmem, size = 0x10000, scoped, tag = 'output window, operand 0, single buffered']
    #allocation9 [shape = 'u8[131072]{0}', space=vmem, size = 0x20000, scoped, tag = 'output window, operand 1, single buffered']
    #allocation10 [shape = 's32[1]{0}', space=sflag, size = 0x4, scoped, tag = 'scoped memory for tpu_custom_call.1']
    %10 = vsyncpa [#allocation3], 0
    %11 = vsyncpa [#allocation6], 0
    %12 = vsyncpa [#allocation4], 0
    %13 = vsyncpa [#allocation10], 0
    // Predicated region
    $region2: #{tpu_custom_call.1} parent=1 // pred_check
      _
    $region3: #{tpu_custom_call.1} parent=1 // pred_check_branch
      %15 = sbr.rel (0) target = $region5
    $region4: #{tpu_custom_call.1} parent=1 // pred_region
      %s17 = ssub.s32 1024, 1024
      %18 = vsyncadd [#allocation3], %s17
      %s19 = sshll.u32 [#allocation2], 4
      %s20 = int_to_ptr.vmem [resolvable:$true] %s19
      %25 = dma.hbm_to_vmem [thread:$0]  %s0, 1024, %s20, [#allocation3], 64, 64, 4
    $region5: #{tpu_custom_call.1} parent=1 // pred_fallthru
      _
    // Predicated region
    $region6: #{tpu_custom_call.1} parent=1 // pred_check
      _
    $region7: #{tpu_custom_call.1} parent=1 // pred_check_branch
      %27 = sbr.rel (0) target = $region9
    $region8: #{tpu_custom_call.1} parent=1 // pred_region
      %s29 = ssub.s32 6144, 6144
      %30 = vsyncadd [#allocation6], %s29
      %s31 = sshll.u32 [#allocation5], 4
      %s32 = int_to_ptr.vmem [resolvable:$true] %s31
      %37 = dma.hbm_to_vmem [thread:$0]  %s1, 6144, %s32, [#allocation6], 384, 384, 24
    $region9: #{tpu_custom_call.1} parent=1 // pred_fallthru
      _
    // Predicated region
    $region10: #{tpu_custom_call.1} parent=1 // pred_check
      _
    $region11: #{tpu_custom_call.1} parent=1 // pred_check_branch
      %39 = sbr.rel (0) target = $region13
    $region12: #{tpu_custom_call.1} parent=1 // pred_region
      %s41 = ssub.s32 96, 96
      %42 = vsyncadd [#allocation6], %s41
      %s44 = sshll.u32 [#allocation7], 4
      %s45 = int_to_ptr.vmem [resolvable:$true] %s44
      %47 = dma.hbm_to_vmem [thread:$0]  %s2, 96, %s45, [#allocation6]
    $region13: #{tpu_custom_call.1} parent=1 // pred_fallthru
      _
    // Predicated region
    $region14: #{tpu_custom_call.1} parent=1 // pred_check
      _
    $region15: #{tpu_custom_call.1} parent=1 // pred_check_branch
      %49 = sbr.rel (0) target = $region17
    $region16: #{tpu_custom_call.1} parent=1 // pred_region
      %50 = dma.done [#allocation3], 1024
    $region17: #{tpu_custom_call.1} parent=1 // pred_fallthru
      _
    // Predicated region
    $region18: #{tpu_custom_call.1} parent=1 // pred_check
      _
    $region19: #{tpu_custom_call.1} parent=1 // pred_check_branch
      %52 = sbr.rel (0) target = $region21
    $region20: #{tpu_custom_call.1} parent=1 // pred_region
      %53 = dma.done [#allocation6], 6144
    $region21: #{tpu_custom_call.1} parent=1 // pred_fallthru
      _
    // Predicated region
    $region22: #{tpu_custom_call.1} parent=1 // pred_check
      _
    $region23: #{tpu_custom_call.1} parent=1 // pred_check_branch
      %55 = sbr.rel (0) target = $region25
    $region24: #{tpu_custom_call.1} parent=1 // pred_region
      %56 = dma.done [#allocation6], 96
    $region25: #{tpu_custom_call.1} parent=1 // pred_fallthru
      _
    %v58 = vld [vmem:[#allocation2] sm:$0xf]
    %v59 = vld [vmem:[#allocation2 + $0x4] sm:$0xf]
    %v60 = vld [vmem:[#allocation2 + $0x8] sm:$0xf]
    %v61 = vld [vmem:[#allocation2 + $0xc] sm:$0xf]
    %v62 = vld [vmem:[#allocation2 + $0x10] sm:$0xf]
    %v63 = vld [vmem:[#allocation2 + $0x14] sm:$0xf]
    %v64 = vld [vmem:[#allocation2 + $0x18] sm:$0xf]
    %v65 = vld [vmem:[#allocation2 + $0x1c] sm:$0xf]
    %v66 = vld [vmem:[#allocation2 + $0x20] sm:$0xf]
    %v67 = vld [vmem:[#allocation2 + $0x24] sm:$0xf]
    %v68 = vld [vmem:[#allocation2 + $0x28] sm:$0xf]
    %v69 = vld [vmem:[#allocation2 + $0x2c] sm:$0xf]
    %v70 = vld [vmem:[#allocation2 + $0x30] sm:$0xf]
    %v71 = vld [vmem:[#allocation2 + $0x34] sm:$0xf]
    %v72 = vld [vmem:[#allocation2 + $0x38] sm:$0xf]
    %v73 = vld [vmem:[#allocation2 + $0x3c] sm:$0xf]
    %v74 = vld [vmem:[#allocation5] sm:$0xff]
    %v75 = vld [vmem:[#allocation5 + $0x8] sm:$0xff]
    %v76 = vld [vmem:[#allocation5 + $0x10] sm:$0xff]
    %v77 = vld [vmem:[#allocation5 + $0x18] sm:$0xff]
    %v78 = vld [vmem:[#allocation5 + $0x20] sm:$0xff]
    %v79 = vld [vmem:[#allocation5 + $0x28] sm:$0xff]
    %v80 = vld [vmem:[#allocation5 + $0x30] sm:$0xff]
    %v81 = vld [vmem:[#allocation5 + $0x38] sm:$0xff]
    %v82 = vld [vmem:[#allocation5 + $0x40] sm:$0xff]
    %v83 = vld [vmem:[#allocation5 + $0x48] sm:$0xff]
    %v84 = vld [vmem:[#allocation5 + $0x50] sm:$0xff]
    %v85 = vld [vmem:[#allocation5 + $0x58] sm:$0xff]
    %v86 = vld [vmem:[#allocation5 + $0x60] sm:$0xff]
    %v87 = vld [vmem:[#allocation5 + $0x68] sm:$0xff]
    %v88 = vld [vmem:[#allocation5 + $0x70] sm:$0xff]
    %v89 = vld [vmem:[#allocation5 + $0x78] sm:$0xff]
    %v90 = vld [vmem:[#allocation5 + $0x80] sm:$0xff]
    %v91 = vld [vmem:[#allocation5 + $0x88] sm:$0xff]
    %v92 = vld [vmem:[#allocation5 + $0x90] sm:$0xff]
    %v93 = vld [vmem:[#allocation5 + $0x98] sm:$0xff]
    %v94 = vld [vmem:[#allocation5 + $0xa0] sm:$0xff]
    %v95 = vld [vmem:[#allocation5 + $0xa8] sm:$0xff]
    %v96 = vld [vmem:[#allocation5 + $0xb0] sm:$0xff]
    %v97 = vld [vmem:[#allocation5 + $0xb8] sm:$0xff]
    %v98 = vld [vmem:[#allocation5 + $0xc0] sm:$0xff]
    %v99 = vld [vmem:[#allocation5 + $0xc8] sm:$0xff]
    %v100 = vld [vmem:[#allocation5 + $0xd0] sm:$0xff]
    %v101 = vld [vmem:[#allocation5 + $0xd8] sm:$0xff]
    %v102 = vld [vmem:[#allocation5 + $0xe0] sm:$0xff]
    %v103 = vld [vmem:[#allocation5 + $0xe8] sm:$0xff]
    %v104 = vld [vmem:[#allocation5 + $0xf0] sm:$0xff]
    %v105 = vld [vmem:[#allocation5 + $0xf8] sm:$0xff]
    %v106 = vld [vmem:[#allocation5 + $0x100] sm:$0xff]
    %v107 = vld [vmem:[#allocation5 + $0x108] sm:$0xff]
    %v108 = vld [vmem:[#allocation5 + $0x110] sm:$0xff]
    %v109 = vld [vmem:[#allocation5 + $0x118] sm:$0xff]
    %v110 = vld [vmem:[#allocation5 + $0x120] sm:$0xff]
    %v111 = vld [vmem:[#allocation5 + $0x128] sm:$0xff]
    %v112 = vld [vmem:[#allocation5 + $0x130] sm:$0xff]
    %v113 = vld [vmem:[#allocation5 + $0x138] sm:$0xff]
    %v114 = vld [vmem:[#allocation5 + $0x140] sm:$0xff]
    %v115 = vld [vmem:[#allocation5 + $0x148] sm:$0xff]
    %v116 = vld [vmem:[#allocation5 + $0x150] sm:$0xff]
    %v117 = vld [vmem:[#allocation5 + $0x158] sm:$0xff]
    %v118 = vld [vmem:[#allocation5 + $0x160] sm:$0xff]
    %v119 = vld [vmem:[#allocation5 + $0x168] sm:$0xff]
    %v120 = vld [vmem:[#allocation5 + $0x170] sm:$0xff]
    %v121 = vld [vmem:[#allocation5 + $0x178] sm:$0xff]
    %v122 = vld [vmem:[#allocation7] sm:$0x3f]
    %v124 = vlaneseq
    %v125 = vshrl.u32 %v124, 7
    %v126 = vsub.s32 0, %v125
    %v127 = vrot.slane %v122, %v126
    %v128 = vlaneseq
    %v129 = vshrl.u32 %v128, 7
    %v130 = vsub.s32 1, %v129
    %v131 = vrot.slane %v122, %v130
    %v132 = vlaneseq
    %v133 = vshrl.u32 %v132, 7
    %v134 = vsub.s32 2, %v133
    %v135 = vrot.slane %v122, %v134
    %v136 = vlaneseq
    %v137 = vshrl.u32 %v136, 7
    %v138 = vsub.s32 3, %v137
    %v139 = vrot.slane %v122, %v138
    %v140 = vlaneseq
    %v141 = vshrl.u32 %v140, 7
    %v142 = vsub.s32 4, %v141
    %v143 = vrot.slane %v122, %v142
    %v144 = vlaneseq
    %v145 = vshrl.u32 %v144, 7
    %v146 = vsub.s32 5, %v145
    %v147 = vrot.slane %v122, %v146
    %v170 = vunpack.c.l.b16 %v58
    %v171 = vunpack.c.l.b16 %v59
    %v172 = vunpack.c.l.b16 %v60
    %v173 = vunpack.c.l.b16 %v61
    %v174 = vunpack.c.l.b16 %v62
    %v175 = vunpack.c.l.b16 %v63
    %v176 = vunpack.c.l.b16 %v64
    %v177 = vunpack.c.l.b16 %v65
    %v178 = vunpack.c.l.b16 %v66
    %v179 = vunpack.c.l.b16 %v67
    %v180 = vunpack.c.l.b16 %v68
    %v181 = vunpack.c.l.b16 %v69
    %v182 = vunpack.c.l.b16 %v70
    %v183 = vunpack.c.l.b16 %v71
    %v184 = vunpack.c.l.b16 %v72
    %v185 = vunpack.c.l.b16 %v73
    %v186 = vpack.c.b16 %v171, %v170
    %v187 = vpack.c.b16 %v173, %v172
    %v188 = vpack.c.b16 %v175, %v174
    %v189 = vpack.c.b16 %v177, %v176
    %v190 = vpack.c.b16 %v179, %v178
    %v191 = vpack.c.b16 %v181, %v180
    %v192 = vpack.c.b16 %v183, %v182
    %v193 = vpack.c.b16 %v185, %v184
    %v250 = vunpack.c.l.b16 %v74
    %v251 = vunpack.c.h.b16 %v74
    %v252 = vunpack.c.l.b16 %v75
    %v253 = vunpack.c.h.b16 %v75
    %v254 = vunpack.c.l.b16 %v76
    %v255 = vunpack.c.h.b16 %v76
    %v256 = vunpack.c.l.b16 %v77
    %v257 = vunpack.c.h.b16 %v77
    %v258 = vunpack.c.l.b16 %v78
    %v259 = vunpack.c.h.b16 %v78
    %v260 = vunpack.c.l.b16 %v79
    %v261 = vunpack.c.h.b16 %v79
    %v262 = vunpack.c.l.b16 %v80
    %v263 = vunpack.c.h.b16 %v80
    %v264 = vunpack.c.l.b16 %v81
    %v265 = vunpack.c.h.b16 %v81
    %v266 = vunpack.c.l.b16 %v82
    %v267 = vunpack.c.h.b16 %v82
    %v268 = vunpack.c.l.b16 %v83
    %v269 = vunpack.c.h.b16 %v83
    %v270 = vunpack.c.l.b16 %v84
    %v271 = vunpack.c.h.b16 %v84
    %v272 = vunpack.c.l.b16 %v85
    %v273 = vunpack.c.h.b16 %v85
    %v274 = vunpack.c.l.b16 %v86
    %v275 = vunpack.c.h.b16 %v86
    %v276 = vunpack.c.l.b16 %v87
    %v277 = vunpack.c.h.b16 %v87
    %v278 = vunpack.c.l.b16 %v88
    %v279 = vunpack.c.h.b16 %v88
    %v280 = vunpack.c.l.b16 %v89
    %v281 = vunpack.c.h.b16 %v89
    %v282 = vunpack.c.l.b16 %v90
    %v283 = vunpack.c.h.b16 %v90
    %v284 = vunpack.c.l.b16 %v91
    %v285 = vunpack.c.h.b16 %v91
    %v286 = vunpack.c.l.b16 %v92
    %v287 = vunpack.c.h.b16 %v92
    %v288 = vunpack.c.l.b16 %v93
    %v289 = vunpack.c.h.b16 %v93
    %v290 = vunpack.c.l.b16 %v94
    %v291 = vunpack.c.h.b16 %v94
    %v292 = vunpack.c.l.b16 %v95
    %v293 = vunpack.c.h.b16 %v95
    %v294 = vunpack.c.l.b16 %v96
    %v295 = vunpack.c.h.b16 %v96
    %v296 = vunpack.c.l.b16 %v97
    %v297 = vunpack.c.h.b16 %v97
    %v298 = vunpack.c.l.b16 %v98
    %v299 = vunpack.c.h.b16 %v98
    %v300 = vunpack.c.l.b16 %v99
    %v301 = vunpack.c.h.b16 %v99
    %v302 = vunpack.c.l.b16 %v100
    %v303 = vunpack.c.h.b16 %v100
    %v304 = vunpack.c.l.b16 %v101
    %v305 = vunpack.c.h.b16 %v101
    %v306 = vunpack.c.l.b16 %v102
    %v307 = vunpack.c.h.b16 %v102
    %v308 = vunpack.c.l.b16 %v103
    %v309 = vunpack.c.h.b16 %v103
    %v310 = vunpack.c.l.b16 %v104
    %v311 = vunpack.c.h.b16 %v104
    %v312 = vunpack.c.l.b16 %v105
    %v313 = vunpack.c.h.b16 %v105
    %v314 = vunpack.c.l.b16 %v106
    %v315 = vunpack.c.h.b16 %v106
    %v316 = vunpack.c.l.b16 %v107
    %v317 = vunpack.c.h.b16 %v107
    %v318 = vunpack.c.l.b16 %v108
    %v319 = vunpack.c.h.b16 %v108
    %v320 = vunpack.c.l.b16 %v109
    %v321 = vunpack.c.h.b16 %v109
    %v322 = vunpack.c.l.b16 %v110
    %v323 = vunpack.c.h.b16 %v110
    %v324 = vunpack.c.l.b16 %v111
    %v325 = vunpack.c.h.b16 %v111
    %v326 = vunpack.c.l.b16 %v112
    %v327 = vunpack.c.h.b16 %v112
    %v328 = vunpack.c.l.b16 %v113
    %v329 = vunpack.c.h.b16 %v113
    %v330 = vunpack.c.l.b16 %v114
    %v331 = vunpack.c.h.b16 %v114
    %v332 = vunpack.c.l.b16 %v115
    %v333 = vunpack.c.h.b16 %v115
    %v334 = vunpack.c.l.b16 %v116
    %v335 = vunpack.c.h.b16 %v116
    %v336 = vunpack.c.l.b16 %v117
    %v337 = vunpack.c.h.b16 %v117
    %v338 = vunpack.c.l.b16 %v118
    %v339 = vunpack.c.h.b16 %v118
    %v340 = vunpack.c.l.b16 %v119
    %v341 = vunpack.c.h.b16 %v119
    %v342 = vunpack.c.l.b16 %v120
    %v343 = vunpack.c.h.b16 %v120
    %v344 = vunpack.c.l.b16 %v121
    %v345 = vunpack.c.h.b16 %v121
    %v346 = vpack.c.b16 %v256, %v250
    %v347 = vpack.c.b16 %v257, %v251
    %v348 = vpack.c.b16 %v258, %v252
    %v349 = vpack.c.b16 %v259, %v253
    %v350 = vpack.c.b16 %v260, %v254
    %v351 = vpack.c.b16 %v261, %v255
    %v352 = vpack.c.b16 %v268, %v262
    %v353 = vpack.c.b16 %v269, %v263
    %v354 = vpack.c.b16 %v270, %v264
    %v355 = vpack.c.b16 %v271, %v265
    %v356 = vpack.c.b16 %v272, %v266
    %v357 = vpack.c.b16 %v273, %v267
    %v358 = vpack.c.b16 %v280, %v274
    %v359 = vpack.c.b16 %v281, %v275
    %v360 = vpack.c.b16 %v282, %v276
    %v361 = vpack.c.b16 %v283, %v277
    %v362 = vpack.c.b16 %v284, %v278
    %v363 = vpack.c.b16 %v285, %v279
    %v364 = vpack.c.b16 %v292, %v286
    %v365 = vpack.c.b16 %v293, %v287
    %v366 = vpack.c.b16 %v294, %v288
    %v367 = vpack.c.b16 %v295, %v289
    %v368 = vpack.c.b16 %v296, %v290
    %v369 = vpack.c.b16 %v297, %v291
    %v370 = vpack.c.b16 %v304, %v298
    %v371 = vpack.c.b16 %v305, %v299
    %v372 = vpack.c.b16 %v306, %v300
    %v373 = vpack.c.b16 %v307, %v301
    %v374 = vpack.c.b16 %v308, %v302
    %v375 = vpack.c.b16 %v309, %v303
    %v376 = vpack.c.b16 %v316, %v310
    %v377 = vpack.c.b16 %v317, %v311
    %v378 = vpack.c.b16 %v318, %v312
    %v379 = vpack.c.b16 %v319, %v313
    %v380 = vpack.c.b16 %v320, %v314
    %v381 = vpack.c.b16 %v321, %v315
    %v382 = vpack.c.b16 %v328, %v322
    %v383 = vpack.c.b16 %v329, %v323
    %v384 = vpack.c.b16 %v330, %v324
    %v385 = vpack.c.b16 %v331, %v325
    %v386 = vpack.c.b16 %v332, %v326
    %v387 = vpack.c.b16 %v333, %v327
    %v388 = vpack.c.b16 %v340, %v334
    %v389 = vpack.c.b16 %v341, %v335
    %v390 = vpack.c.b16 %v342, %v336
    %v391 = vpack.c.b16 %v343, %v337
    %v392 = vpack.c.b16 %v344, %v338
    %v393 = vpack.c.b16 %v345, %v339
    %442 = vmatprep.subr.bf16.mxu0 %v347
    %443 = vmatpush1.bf16.msra.mxu0 %v346
    %444 = vmatprep.subr.bf16.mxu0 %v353
    %445 = vmatpush1.bf16.msra.mxu0 %v352
    %446 = vmatprep.subr.bf16.mxu0 %v359
    %447 = vmatpush1.bf16.msra.mxu0 %v358
    %448 = vmatprep.subr.bf16.mxu0 %v365
    %449 = vmatpush1.bf16.msra.mxu0 %v364
    %450 = vmatprep.subr.bf16.mxu0 %v371
    %451 = vmatpush1.bf16.msra.mxu0 %v370
    %452 = vmatprep.subr.bf16.mxu0 %v377
    %453 = vmatpush1.bf16.msra.mxu0 %v376
    %454 = vmatprep.subr.bf16.mxu0 %v383
    %455 = vmatpush1.bf16.msra.mxu0 %v382
    %456 = vmatprep.subr.bf16.mxu0 %v389
    %457 = vmatpush1.bf16.msra.mxu0 %v388
    %458 = vmatprep.subr.bf16.mxu0 0
    %459 = vmatpush1.bf16.msra.mxu0 0
    %460 = vmatprep.subr.bf16.mxu0 0
    %461 = vmatpush1.bf16.msra.mxu0 0
    %462 = vmatprep.subr.bf16.mxu0 0
    %463 = vmatpush1.bf16.msra.mxu0 0
    %464 = vmatprep.subr.bf16.mxu0 0
    %465 = vmatpush1.bf16.msra.mxu0 0
    %466 = vmatprep.subr.bf16.mxu0 0
    %467 = vmatpush1.bf16.msra.mxu0 0
    %468 = vmatprep.subr.bf16.mxu0 0
    %469 = vmatpush1.bf16.msra.mxu0 0
    %470 = vmatprep.subr.bf16.mxu0 0
    %471 = vmatpush1.bf16.msra.mxu0 0
    %472 = vmatprep.subr.bf16.mxu0 0
    %473 = vmatpush1.bf16.msra.mxu0 0
    %474 = vmatprep.mubr.bf16.mxu0 0
    %475 = vmatmul.mubr.bf16.gmra.mrb[0].mxu0 %v186
    %v476 = vpop.f32.mrb[0].mxu0
    %v477 = vadd.f32 %v127, %v476
    %v478 = vpop.f32.mrb[0].mxu0
    %v479 = vadd.f32 %v131, %v478
    %v480 = vpop.f32.mrb[0].mxu0
    %v481 = vadd.f32 %v127, %v480
    %v482 = vpop.f32.mrb[0].mxu0
    %v483 = vadd.f32 %v131, %v482
    %484 = vmatprep.mubr.bf16.mxu0 0
    %485 = vmatmul.mubr.bf16.gmra.mrb[0].mxu0 %v187
    %v486 = vpop.f32.mrb[0].mxu0
    %v487 = vadd.f32 %v127, %v486
    %v488 = vpop.f32.mrb[0].mxu0
    %v489 = vadd.f32 %v131, %v488
    %v490 = vpop.f32.mrb[0].mxu0
    %v491 = vadd.f32 %v127, %v490
    %v492 = vpop.f32.mrb[0].mxu0
    %v493 = vadd.f32 %v131, %v492
    %494 = vmatprep.mubr.bf16.mxu0 0
    %495 = vmatmul.mubr.bf16.gmra.mrb[0].mxu0 %v188
    %v496 = vpop.f32.mrb[0].mxu0
    %v497 = vadd.f32 %v127, %v496
    %v498 = vpop.f32.mrb[0].mxu0
    %v499 = vadd.f32 %v131, %v498
    %v500 = vpop.f32.mrb[0].mxu0
    %v501 = vadd.f32 %v127, %v500
    %v502 = vpop.f32.mrb[0].mxu0
    %v503 = vadd.f32 %v131, %v502
    %504 = vmatprep.mubr.bf16.mxu0 0
    %505 = vmatmul.mubr.bf16.gmra.mrb[0].mxu0 %v189
    %v506 = vpop.f32.mrb[0].mxu0
    %v507 = vadd.f32 %v127, %v506
    %v508 = vpop.f32.mrb[0].mxu0
    %v509 = vadd.f32 %v131, %v508
    %v510 = vpop.f32.mrb[0].mxu0
    %v511 = vadd.f32 %v127, %v510
    %v512 = vpop.f32.mrb[0].mxu0
    %v513 = vadd.f32 %v131, %v512
    %514 = vmatprep.mubr.bf16.mxu0 0
    %515 = vmatmul.mubr.bf16.gmra.mrb[0].mxu0 %v190
    %v516 = vpop.f32.mrb[0].mxu0
    %v517 = vadd.f32 %v127, %v516
    %v518 = vpop.f32.mrb[0].mxu0
    %v519 = vadd.f32 %v131, %v518
    %v520 = vpop.f32.mrb[0].mxu0
    %v521 = vadd.f32 %v127, %v520
    %v522 = vpop.f32.mrb[0].mxu0
    %v523 = vadd.f32 %v131, %v522
    %524 = vmatprep.mubr.bf16.mxu0 0
    %525 = vmatmul.mubr.bf16.gmra.mrb[0].mxu0 %v191
    %v526 = vpop.f32.mrb[0].mxu0
    %v527 = vadd.f32 %v127, %v526
    %v528 = vpop.f32.mrb[0].mxu0
    %v529 = vadd.f32 %v131, %v528
    %v530 = vpop.f32.mrb[0].mxu0
    %v531 = vadd.f32 %v127, %v530
    %v532 = vpop.f32.mrb[0].mxu0
    %v533 = vadd.f32 %v131, %v532
    %534 = vmatprep.mubr.bf16.mxu0 0
    %535 = vmatmul.mubr.bf16.gmra.mrb[0].mxu0 %v192
    %v536 = vpop.f32.mrb[0].mxu0
    %v537 = vadd.f32 %v127, %v536
    %v538 = vpop.f32.mrb[0].mxu0
    %v539 = vadd.f32 %v131, %v538
    %v540 = vpop.f32.mrb[0].mxu0
    %v541 = vadd.f32 %v127, %v540
    %v542 = vpop.f32.mrb[0].mxu0
    %v543 = vadd.f32 %v131, %v542
    %544 = vmatprep.mubr.bf16.mxu0 0
    %545 = vmatmul.mubr.bf16.gmra.mrb[0].mxu0 %v193
    %v546 = vpop.f32.mrb[0].mxu0
    %v547 = vadd.f32 %v127, %v546
    %v548 = vpop.f32.mrb[0].mxu0
    %v549 = vadd.f32 %v131, %v548
    %v550 = vpop.f32.mrb[0].mxu0
    %v551 = vadd.f32 %v127, %v550
    %v552 = vpop.f32.mrb[0].mxu0
    %v553 = vadd.f32 %v131, %v552
    %554 = vdwg.mxu0
    %555 = vmatprep.subr.bf16.mxu0 %v349
    %556 = vmatpush1.bf16.msra.mxu0 %v348
    %557 = vmatprep.subr.bf16.mxu0 %v355
    %558 = vmatpush1.bf16.msra.mxu0 %v354
    %559 = vmatprep.subr.bf16.mxu0 %v361
    %560 = vmatpush1.bf16.msra.mxu0 %v360
    %561 = vmatprep.subr.bf16.mxu0 %v367
    %562 = vmatpush1.bf16.msra.mxu0 %v366
    %563 = vmatprep.subr.bf16.mxu0 %v373
    %564 = vmatpush1.bf16.msra.mxu0 %v372
    %565 = vmatprep.subr.bf16.mxu0 %v379
    %566 = vmatpush1.bf16.msra.mxu0 %v378
    %567 = vmatprep.subr.bf16.mxu0 %v385
    %568 = vmatpush1.bf16.msra.mxu0 %v384
    %569 = vmatprep.subr.bf16.mxu0 %v391
    %570 = vmatpush1.bf16.msra.mxu0 %v390
    %571 = vmatprep.subr.bf16.mxu0 0
    %572 = vmatpush1.bf16.msra.mxu0 0
    %573 = vmatprep.subr.bf16.mxu0 0
    %574 = vmatpush1.bf16.msra.mxu0 0
    %575 = vmatprep.subr.bf16.mxu0 0
    %576 = vmatpush1.bf16.msra.mxu0 0
    %577 = vmatprep.subr.bf16.mxu0 0
    %578 = vmatpush1.bf16.msra.mxu0 0
    %579 = vmatprep.subr.bf16.mxu0 0
    %580 = vmatpush1.bf16.msra.mxu0 0
    %581 = vmatprep.subr.bf16.mxu0 0
    %582 = vmatpush1.bf16.msra.mxu0 0
    %583 = vmatprep.subr.bf16.mxu0 0
    %584 = vmatpush1.bf16.msra.mxu0 0
    %585 = vmatprep.subr.bf16.mxu0 0
    %586 = vmatpush1.bf16.msra.mxu0 0
    %587 = vmatprep.mubr.bf16.mxu0 0
    %588 = vmatmul.mubr.bf16.gmra.mrb[0].mxu0 %v186
    %v589 = vpop.f32.mrb[0].mxu0
    %v590 = vadd.f32 %v135, %v589
    %v591 = vpop.f32.mrb[0].mxu0
    %v592 = vadd.f32 %v139, %v591
    %v593 = vpop.f32.mrb[0].mxu0
    %v594 = vadd.f32 %v135, %v593
    %v595 = vpop.f32.mrb[0].mxu0
    %v596 = vadd.f32 %v139, %v595
    %597 = vmatprep.mubr.bf16.mxu0 0
    %598 = vmatmul.mubr.bf16.gmra.mrb[0].mxu0 %v187
    %v599 = vpop.f32.mrb[0].mxu0
    %v600 = vadd.f32 %v135, %v599
    %v601 = vpop.f32.mrb[0].mxu0
    %v602 = vadd.f32 %v139, %v601
    %v603 = vpop.f32.mrb[0].mxu0
    %v604 = vadd.f32 %v135, %v603
    %v605 = vpop.f32.mrb[0].mxu0
    %v606 = vadd.f32 %v139, %v605
    %607 = vmatprep.mubr.bf16.mxu0 0
    %608 = vmatmul.mubr.bf16.gmra.mrb[0].mxu0 %v188
    %v609 = vpop.f32.mrb[0].mxu0
    %v610 = vadd.f32 %v135, %v609
    %v611 = vpop.f32.mrb[0].mxu0
    %v612 = vadd.f32 %v139, %v611
    %v613 = vpop.f32.mrb[0].mxu0
    %v614 = vadd.f32 %v135, %v613
    %v615 = vpop.f32.mrb[0].mxu0
    %v616 = vadd.f32 %v139, %v615
    %617 = vmatprep.mubr.bf16.mxu0 0
    %618 = vmatmul.mubr.bf16.gmra.mrb[0].mxu0 %v189
    %v619 = vpop.f32.mrb[0].mxu0
    %v620 = vadd.f32 %v135, %v619
    %v621 = vpop.f32.mrb[0].mxu0
    %v622 = vadd.f32 %v139, %v621
    %v623 = vpop.f32.mrb[0].mxu0
    %v624 = vadd.f32 %v135, %v623
    %v625 = vpop.f32.mrb[0].mxu0
    %v626 = vadd.f32 %v139, %v625
    %627 = vmatprep.mubr.bf16.mxu0 0
    %628 = vmatmul.mubr.bf16.gmra.mrb[0].mxu0 %v190
    %v629 = vpop.f32.mrb[0].mxu0
    %v630 = vadd.f32 %v135, %v629
    %v631 = vpop.f32.mrb[0].mxu0
    %v632 = vadd.f32 %v139, %v631
    %v633 = vpop.f32.mrb[0].mxu0
    %v634 = vadd.f32 %v135, %v633
    %v635 = vpop.f32.mrb[0].mxu0
    %v636 = vadd.f32 %v139, %v635
    %637 = vmatprep.mubr.bf16.mxu0 0
    %638 = vmatmul.mubr.bf16.gmra.mrb[0].mxu0 %v191
    %v639 = vpop.f32.mrb[0].mxu0
    %v640 = vadd.f32 %v135, %v639
    %v641 = vpop.f32.mrb[0].mxu0
    %v642 = vadd.f32 %v139, %v641
    %v643 = vpop.f32.mrb[0].mxu0
    %v644 = vadd.f32 %v135, %v643
    %v645 = vpop.f32.mrb[0].mxu0
    %v646 = vadd.f32 %v139, %v645
    %647 = vmatprep.mubr.bf16.mxu0 0
    %648 = vmatmul.mubr.bf16.gmra.mrb[0].mxu0 %v192
    %v649 = vpop.f32.mrb[0].mxu0
    %v650 = vadd.f32 %v135, %v649
    %v651 = vpop.f32.mrb[0].mxu0
    %v652 = vadd.f32 %v139, %v651
    %v653 = vpop.f32.mrb[0].mxu0
    %v654 = vadd.f32 %v135, %v653
    %v655 = vpop.f32.mrb[0].mxu0
    %v656 = vadd.f32 %v139, %v655
    %657 = vmatprep.mubr.bf16.mxu0 0
    %658 = vmatmul.mubr.bf16.gmra.mrb[0].mxu0 %v193
    %v659 = vpop.f32.mrb[0].mxu0
    %v660 = vadd.f32 %v135, %v659
    %v661 = vpop.f32.mrb[0].mxu0
    %v662 = vadd.f32 %v139, %v661
    %v663 = vpop.f32.mrb[0].mxu0
    %v664 = vadd.f32 %v135, %v663
    %v665 = vpop.f32.mrb[0].mxu0
    %v666 = vadd.f32 %v139, %v665
    %667 = vdwg.mxu0
    %668 = vmatprep.subr.bf16.mxu0 %v351
    %669 = vmatpush1.bf16.msra.mxu0 %v350
    %670 = vmatprep.subr.bf16.mxu0 %v357
    %671 = vmatpush1.bf16.msra.mxu0 %v356
    %672 = vmatprep.subr.bf16.mxu0 %v363
    %673 = vmatpush1.bf16.msra.mxu0 %v362
    %674 = vmatprep.subr.bf16.mxu0 %v369
    %675 = vmatpush1.bf16.msra.mxu0 %v368
    %676 = vmatprep.subr.bf16.mxu0 %v375
    %677 = vmatpush1.bf16.msra.mxu0 %v374
    %678 = vmatprep.subr.bf16.mxu0 %v381
    %679 = vmatpush1.bf16.msra.mxu0 %v380
    %680 = vmatprep.subr.bf16.mxu0 %v387
    %681 = vmatpush1.bf16.msra.mxu0 %v386
    %682 = vmatprep.subr.bf16.mxu0 %v393
    %683 = vmatpush1.bf16.msra.mxu0 %v392
    %684 = vmatprep.subr.bf16.mxu0 0
    %685 = vmatpush1.bf16.msra.mxu0 0
    %686 = vmatprep.subr.bf16.mxu0 0
    %687 = vmatpush1.bf16.msra.mxu0 0
    %688 = vmatprep.subr.bf16.mxu0 0
    %689 = vmatpush1.bf16.msra.mxu0 0
    %690 = vmatprep.subr.bf16.mxu0 0
    %691 = vmatpush1.bf16.msra.mxu0 0
    %692 = vmatprep.subr.bf16.mxu0 0
    %693 = vmatpush1.bf16.msra.mxu0 0
    %694 = vmatprep.subr.bf16.mxu0 0
    %695 = vmatpush1.bf16.msra.mxu0 0
    %696 = vmatprep.subr.bf16.mxu0 0
    %697 = vmatpush1.bf16.msra.mxu0 0
    %698 = vmatprep.subr.bf16.mxu0 0
    %699 = vmatpush1.bf16.msra.mxu0 0
    %700 = vmatprep.mubr.bf16.mxu0 0
    %701 = vmatmul.mubr.bf16.gmra.mrb[0].mxu0 %v186
    %v702 = vpop.f32.mrb[0].mxu0
    %v703 = vadd.f32 %v143, %v702
    %v704 = vpop.f32.mrb[0].mxu0
    %v705 = vadd.f32 %v147, %v704
    %v706 = vpop.f32.mrb[0].mxu0
    %v707 = vadd.f32 %v143, %v706
    %v708 = vpop.f32.mrb[0].mxu0
    %v709 = vadd.f32 %v147, %v708
    %710 = vmatprep.mubr.bf16.mxu0 0
    %711 = vmatmul.mubr.bf16.gmra.mrb[0].mxu0 %v187
    %v712 = vpop.f32.mrb[0].mxu0
    %v713 = vadd.f32 %v143, %v712
    %v714 = vpop.f32.mrb[0].mxu0
    %v715 = vadd.f32 %v147, %v714
    %v716 = vpop.f32.mrb[0].mxu0
    %v717 = vadd.f32 %v143, %v716
    %v718 = vpop.f32.mrb[0].mxu0
    %v719 = vadd.f32 %v147, %v718
    %720 = vmatprep.mubr.bf16.mxu0 0
    %721 = vmatmul.mubr.bf16.gmra.mrb[0].mxu0 %v188
    %v722 = vpop.f32.mrb[0].mxu0
    %v723 = vadd.f32 %v143, %v722
    %v724 = vpop.f32.mrb[0].mxu0
    %v725 = vadd.f32 %v147, %v724
    %v726 = vpop.f32.mrb[0].mxu0
    %v727 = vadd.f32 %v143, %v726
    %v728 = vpop.f32.mrb[0].mxu0
    %v729 = vadd.f32 %v147, %v728
    %730 = vmatprep.mubr.bf16.mxu0 0
    %731 = vmatmul.mubr.bf16.gmra.mrb[0].mxu0 %v189
    %v732 = vpop.f32.mrb[0].mxu0
    %v733 = vadd.f32 %v143, %v732
    %v734 = vpop.f32.mrb[0].mxu0
    %v735 = vadd.f32 %v147, %v734
    %v736 = vpop.f32.mrb[0].mxu0
    %v737 = vadd.f32 %v143, %v736
    %v738 = vpop.f32.mrb[0].mxu0
    %v739 = vadd.f32 %v147, %v738
    %740 = vmatprep.mubr.bf16.mxu0 0
    %741 = vmatmul.mubr.bf16.gmra.mrb[0].mxu0 %v190
    %v742 = vpop.f32.mrb[0].mxu0
    %v743 = vadd.f32 %v143, %v742
    %v744 = vpop.f32.mrb[0].mxu0
    %v745 = vadd.f32 %v147, %v744
    %v746 = vpop.f32.mrb[0].mxu0
    %v747 = vadd.f32 %v143, %v746
    %v748 = vpop.f32.mrb[0].mxu0
    %v749 = vadd.f32 %v147, %v748
    %750 = vmatprep.mubr.bf16.mxu0 0
    %751 = vmatmul.mubr.bf16.gmra.mrb[0].mxu0 %v191
    %v752 = vpop.f32.mrb[0].mxu0
    %v753 = vadd.f32 %v143, %v752
    %v754 = vpop.f32.mrb[0].mxu0
    %v755 = vadd.f32 %v147, %v754
    %v756 = vpop.f32.mrb[0].mxu0
    %v757 = vadd.f32 %v143, %v756
    %v758 = vpop.f32.mrb[0].mxu0
    %v759 = vadd.f32 %v147, %v758
    %760 = vmatprep.mubr.bf16.mxu0 0
    %761 = vmatmul.mubr.bf16.gmra.mrb[0].mxu0 %v192
    %v762 = vpop.f32.mrb[0].mxu0
    %v763 = vadd.f32 %v143, %v762
    %v764 = vpop.f32.mrb[0].mxu0
    %v765 = vadd.f32 %v147, %v764
    %v766 = vpop.f32.mrb[0].mxu0
    %v767 = vadd.f32 %v143, %v766
    %v768 = vpop.f32.mrb[0].mxu0
    %v769 = vadd.f32 %v147, %v768
    %770 = vmatprep.mubr.bf16.mxu0 0
    %771 = vmatmul.mubr.bf16.gmra.mrb[0].mxu0 %v193
    %v772 = vpop.f32.mrb[0].mxu0
    %v773 = vadd.f32 %v143, %v772
    %v774 = vpop.f32.mrb[0].mxu0
    %v775 = vadd.f32 %v147, %v774
    %v776 = vpop.f32.mrb[0].mxu0
    %v777 = vadd.f32 %v143, %v776
    %v778 = vpop.f32.mrb[0].mxu0
    %v779 = vadd.f32 %v147, %v778
    %780 = vdwg.mxu0
    %v781 = vpack.c.bf16 %v481, %v477
    %v782 = vpack.c.bf16 %v483, %v479
    %v783 = vpack.c.bf16 %v491, %v487
    %v784 = vpack.c.bf16 %v493, %v489
    %v785 = vpack.c.bf16 %v501, %v497
    %v786 = vpack.c.bf16 %v503, %v499
    %v787 = vpack.c.bf16 %v511, %v507
    %v788 = vpack.c.bf16 %v513, %v509
    %v789 = vpack.c.bf16 %v521, %v517
    %v790 = vpack.c.bf16 %v523, %v519
    %v791 = vpack.c.bf16 %v531, %v527
    %v792 = vpack.c.bf16 %v533, %v529
    %v793 = vpack.c.bf16 %v541, %v537
    %v794 = vpack.c.bf16 %v543, %v539
    %v795 = vpack.c.bf16 %v551, %v547
    %v796 = vpack.c.bf16 %v553, %v549
    %v813 = vunpack.c.l.b16 %v781
    %v814 = vunpack.c.l.b16 %v782
    %v815 = vunpack.c.h.b16 %v781
    %v816 = vunpack.c.h.b16 %v782
    %v817 = vunpack.c.l.b16 %v783
    %v818 = vunpack.c.l.b16 %v784
    %v819 = vunpack.c.h.b16 %v783
    %v820 = vunpack.c.h.b16 %v784
    %v821 = vunpack.c.l.b16 %v785
    %v822 = vunpack.c.l.b16 %v786
    %v823 = vunpack.c.h.b16 %v785
    %v824 = vunpack.c.h.b16 %v786
    %v825 = vunpack.c.l.b16 %v787
    %v826 = vunpack.c.l.b16 %v788
    %v827 = vunpack.c.h.b16 %v787
    %v828 = vunpack.c.h.b16 %v788
    %v829 = vunpack.c.l.b16 %v789
    %v830 = vunpack.c.l.b16 %v790
    %v831 = vunpack.c.h.b16 %v789
    %v832 = vunpack.c.h.b16 %v790
    %v833 = vunpack.c.l.b16 %v791
    %v834 = vunpack.c.l.b16 %v792
    %v835 = vunpack.c.h.b16 %v791
    %v836 = vunpack.c.h.b16 %v792
    %v837 = vunpack.c.l.b16 %v793
    %v838 = vunpack.c.l.b16 %v794
    %v839 = vunpack.c.h.b16 %v793
    %v840 = vunpack.c.h.b16 %v794
    %v841 = vunpack.c.l.b16 %v795
    %v842 = vunpack.c.l.b16 %v796
    %v843 = vunpack.c.h.b16 %v795
    %v844 = vunpack.c.h.b16 %v796
    %v845 = vpack.c.b16 %v814, %v813
    %v846 = vpack.c.b16 %v816, %v815
    %v847 = vpack.c.b16 %v818, %v817
    %v848 = vpack.c.b16 %v820, %v819
    %v849 = vpack.c.b16 %v822, %v821
    %v850 = vpack.c.b16 %v824, %v823
    %v851 = vpack.c.b16 %v826, %v825
    %v852 = vpack.c.b16 %v828, %v827
    %v853 = vpack.c.b16 %v830, %v829
    %v854 = vpack.c.b16 %v832, %v831
    %v855 = vpack.c.b16 %v834, %v833
    %v856 = vpack.c.b16 %v836, %v835
    %v857 = vpack.c.b16 %v838, %v837
    %v858 = vpack.c.b16 %v840, %v839
    %v859 = vpack.c.b16 %v842, %v841
    %v860 = vpack.c.b16 %v844, %v843
    %877 = vst [vmem:[#allocation8] sm:$0xff] %v845
    %878 = vst [vmem:[#allocation8 + $0x8] sm:$0xff] %v846
    %879 = vst [vmem:[#allocation8 + $0x10] sm:$0xff] %v847
    %880 = vst [vmem:[#allocation8 + $0x18] sm:$0xff] %v848
    %881 = vst [vmem:[#allocation8 + $0x20] sm:$0xff] %v849
    %882 = vst [vmem:[#allocation8 + $0x28] sm:$0xff] %v850
    %883 = vst [vmem:[#allocation8 + $0x30] sm:$0xff] %v851
    %884 = vst [vmem:[#allocation8 + $0x38] sm:$0xff] %v852
    %885 = vst [vmem:[#allocation8 + $0x40] sm:$0xff] %v853
    %886 = vst [vmem:[#allocation8 + $0x48] sm:$0xff] %v854
    %887 = vst [vmem:[#allocation8 + $0x50] sm:$0xff] %v855
    %888 = vst [vmem:[#allocation8 + $0x58] sm:$0xff] %v856
    %889 = vst [vmem:[#allocation8 + $0x60] sm:$0xff] %v857
    %890 = vst [vmem:[#allocation8 + $0x68] sm:$0xff] %v858
    %891 = vst [vmem:[#allocation8 + $0x70] sm:$0xff] %v859
    %892 = vst [vmem:[#allocation8 + $0x78] sm:$0xff] %v860
    %v893 = vpack.c.bf16 %v594, %v590
    %v894 = vpack.c.bf16 %v596, %v592
    %v895 = vpack.c.bf16 %v707, %v703
    %v896 = vpack.c.bf16 %v709, %v705
    %v897 = vpack.c.bf16 %v604, %v600
    %v898 = vpack.c.bf16 %v606, %v602
    %v899 = vpack.c.bf16 %v717, %v713
    %v900 = vpack.c.bf16 %v719, %v715
    %v901 = vpack.c.bf16 %v614, %v610
    %v902 = vpack.c.bf16 %v616, %v612
    %v903 = vpack.c.bf16 %v727, %v723
    %v904 = vpack.c.bf16 %v729, %v725
    %v905 = vpack.c.bf16 %v624, %v620
    %v906 = vpack.c.bf16 %v626, %v622
    %v907 = vpack.c.bf16 %v737, %v733
    %v908 = vpack.c.bf16 %v739, %v735
    %v909 = vpack.c.bf16 %v634, %v630
    %v910 = vpack.c.bf16 %v636, %v632
    %v911 = vpack.c.bf16 %v747, %v743
    %v912 = vpack.c.bf16 %v749, %v745
    %v913 = vpack.c.bf16 %v644, %v640
    %v914 = vpack.c.bf16 %v646, %v642
    %v915 = vpack.c.bf16 %v757, %v753
    %v916 = vpack.c.bf16 %v759, %v755
    %v917 = vpack.c.bf16 %v654, %v650
    %v918 = vpack.c.bf16 %v656, %v652
    %v919 = vpack.c.bf16 %v767, %v763
    %v920 = vpack.c.bf16 %v769, %v765
    %v921 = vpack.c.bf16 %v664, %v660
    %v922 = vpack.c.bf16 %v666, %v662
    %v923 = vpack.c.bf16 %v777, %v773
    %v924 = vpack.c.bf16 %v779, %v775
    %v957 = vunpack.c.l.b16 %v893
    %v958 = vunpack.c.l.b16 %v894
    %v959 = vunpack.c.l.b16 %v895
    %v960 = vunpack.c.l.b16 %v896
    %v961 = vunpack.c.h.b16 %v893
    %v962 = vunpack.c.h.b16 %v894
    %v963 = vunpack.c.h.b16 %v895
    %v964 = vunpack.c.h.b16 %v896
    %v965 = vunpack.c.l.b16 %v897
    %v966 = vunpack.c.l.b16 %v898
    %v967 = vunpack.c.l.b16 %v899
    %v968 = vunpack.c.l.b16 %v900
    %v969 = vunpack.c.h.b16 %v897
    %v970 = vunpack.c.h.b16 %v898
    %v971 = vunpack.c.h.b16 %v899
    %v972 = vunpack.c.h.b16 %v900
    %v973 = vunpack.c.l.b16 %v901
    %v974 = vunpack.c.l.b16 %v902
    %v975 = vunpack.c.l.b16 %v903
    %v976 = vunpack.c.l.b16 %v904
    %v977 = vunpack.c.h.b16 %v901
    %v978 = vunpack.c.h.b16 %v902
    %v979 = vunpack.c.h.b16 %v903
    %v980 = vunpack.c.h.b16 %v904
    %v981 = vunpack.c.l.b16 %v905
    %v982 = vunpack.c.l.b16 %v906
    %v983 = vunpack.c.l.b16 %v907
    %v984 = vunpack.c.l.b16 %v908
    %v985 = vunpack.c.h.b16 %v905
    %v986 = vunpack.c.h.b16 %v906
    %v987 = vunpack.c.h.b16 %v907
    %v988 = vunpack.c.h.b16 %v908
    %v989 = vunpack.c.l.b16 %v909
    %v990 = vunpack.c.l.b16 %v910
    %v991 = vunpack.c.l.b16 %v911
    %v992 = vunpack.c.l.b16 %v912
    %v993 = vunpack.c.h.b16 %v909
    %v994 = vunpack.c.h.b16 %v910
    %v995 = vunpack.c.h.b16 %v911
    %v996 = vunpack.c.h.b16 %v912
    %v997 = vunpack.c.l.b16 %v913
    %v998 = vunpack.c.l.b16 %v914
    %v999 = vunpack.c.l.b16 %v915
    %v1000 = vunpack.c.l.b16 %v916
    %v1001 = vunpack.c.h.b16 %v913
    %v1002 = vunpack.c.h.b16 %v914
    %v1003 = vunpack.c.h.b16 %v915
    %v1004 = vunpack.c.h.b16 %v916
    %v1005 = vunpack.c.l.b16 %v917
    %v1006 = vunpack.c.l.b16 %v918
    %v1007 = vunpack.c.l.b16 %v919
    %v1008 = vunpack.c.l.b16 %v920
    %v1009 = vunpack.c.h.b16 %v917
    %v1010 = vunpack.c.h.b16 %v918
    %v1011 = vunpack.c.h.b16 %v919
    %v1012 = vunpack.c.h.b16 %v920
    %v1013 = vunpack.c.l.b16 %v921
    %v1014 = vunpack.c.l.b16 %v922
    %v1015 = vunpack.c.l.b16 %v923
    %v1016 = vunpack.c.l.b16 %v924
    %v1017 = vunpack.c.h.b16 %v921
    %v1018 = vunpack.c.h.b16 %v922
    %v1019 = vunpack.c.h.b16 %v923
    %v1020 = vunpack.c.h.b16 %v924
    %v1021 = vpack.c.b16 %v958, %v957
    %v1022 = vpack.c.b16 %v960, %v959
    %v1023 = vpack.c.b16 %v962, %v961
    %v1024 = vpack.c.b16 %v964, %v963
    %v1025 = vpack.c.b16 %v966, %v965
    %v1026 = vpack.c.b16 %v968, %v967
    %v1027 = vpack.c.b16 %v970, %v969
    %v1028 = vpack.c.b16 %v972, %v971
    %v1029 = vpack.c.b16 %v974, %v973
    %v1030 = vpack.c.b16 %v976, %v975
    %v1031 = vpack.c.b16 %v978, %v977
    %v1032 = vpack.c.b16 %v980, %v979
    %v1033 = vpack.c.b16 %v982, %v981
    %v1034 = vpack.c.b16 %v984, %v983
    %v1035 = vpack.c.b16 %v986, %v985
    %v1036 = vpack.c.b16 %v988, %v987
    %v1037 = vpack.c.b16 %v990, %v989
    %v1038 = vpack.c.b16 %v992, %v991
    %v1039 = vpack.c.b16 %v994, %v993
    %v1040 = vpack.c.b16 %v996, %v995
    %v1041 = vpack.c.b16 %v998, %v997
    %v1042 = vpack.c.b16 %v1000, %v999
    %v1043 = vpack.c.b16 %v1002, %v1001
    %v1044 = vpack.c.b16 %v1004, %v1003
    %v1045 = vpack.c.b16 %v1006, %v1005
    %v1046 = vpack.c.b16 %v1008, %v1007
    %v1047 = vpack.c.b16 %v1010, %v1009
    %v1048 = vpack.c.b16 %v1012, %v1011
    %v1049 = vpack.c.b16 %v1014, %v1013
    %v1050 = vpack.c.b16 %v1016, %v1015
    %v1051 = vpack.c.b16 %v1018, %v1017
    %v1052 = vpack.c.b16 %v1020, %v1019
    %1085 = vst [vmem:[#allocation9] sm:$0xff] %v1021
    %1086 = vst [vmem:[#allocation9 + $0x8] sm:$0xff] %v1022
    %1087 = vst [vmem:[#allocation9 + $0x10] sm:$0xff] %v1023
    %1088 = vst [vmem:[#allocation9 + $0x18] sm:$0xff] %v1024
    %1089 = vst [vmem:[#allocation9 + $0x20] sm:$0xff] %v1025
    %1090 = vst [vmem:[#allocation9 + $0x28] sm:$0xff] %v1026
    %1091 = vst [vmem:[#allocation9 + $0x30] sm:$0xff] %v1027
    %1092 = vst [vmem:[#allocation9 + $0x38] sm:$0xff] %v1028
    %1093 = vst [vmem:[#allocation9 + $0x40] sm:$0xff] %v1029
    %1094 = vst [vmem:[#allocation9 + $0x48] sm:$0xff] %v1030
    %1095 = vst [vmem:[#allocation9 + $0x50] sm:$0xff] %v1031
    %1096 = vst [vmem:[#allocation9 + $0x58] sm:$0xff] %v1032
    %1097 = vst [vmem:[#allocation9 + $0x60] sm:$0xff] %v1033
    %1098 = vst [vmem:[#allocation9 + $0x68] sm:$0xff] %v1034
    %1099 = vst [vmem:[#allocation9 + $0x70] sm:$0xff] %v1035
    %1100 = vst [vmem:[#allocation9 + $0x78] sm:$0xff] %v1036
    %1101 = vst [vmem:[#allocation9 + $0x80] sm:$0xff] %v1037
    %1102 = vst [vmem:[#allocation9 + $0x88] sm:$0xff] %v1038
    %1103 = vst [vmem:[#allocation9 + $0x90] sm:$0xff] %v1039
    %1104 = vst [vmem:[#allocation9 + $0x98] sm:$0xff] %v1040
    %1105 = vst [vmem:[#allocation9 + $0xa0] sm:$0xff] %v1041
    %1106 = vst [vmem:[#allocation9 + $0xa8] sm:$0xff] %v1042
    %1107 = vst [vmem:[#allocation9 + $0xb0] sm:$0xff] %v1043
    %1108 = vst [vmem:[#allocation9 + $0xb8] sm:$0xff] %v1044
    %1109 = vst [vmem:[#allocation9 + $0xc0] sm:$0xff] %v1045
    %1110 = vst [vmem:[#allocation9 + $0xc8] sm:$0xff] %v1046
    %1111 = vst [vmem:[#allocation9 + $0xd0] sm:$0xff] %v1047
    %1112 = vst [vmem:[#allocation9 + $0xd8] sm:$0xff] %v1048
    %1113 = vst [vmem:[#allocation9 + $0xe0] sm:$0xff] %v1049
    %1114 = vst [vmem:[#allocation9 + $0xe8] sm:$0xff] %v1050
    %1115 = vst [vmem:[#allocation9 + $0xf0] sm:$0xff] %v1051
    %1116 = vst [vmem:[#allocation9 + $0xf8] sm:$0xff] %v1052
    // Predicated region
    $region26: #{tpu_custom_call.1} parent=1 // pred_check
      _
    $region27: #{tpu_custom_call.1} parent=1 // pred_check_branch
      %1118 = sbr.rel (0) target = $region29
    $region28: #{tpu_custom_call.1} parent=1 // pred_region
      %s1120 = ssub.s32 2048, 2048
      %1121 = vsyncadd [#allocation4], %s1120
      %s1122 = sshll.u32 [#allocation8], 4
      %s1123 = int_to_ptr.vmem [resolvable:$true] %s1122
      %1128 = dma.vmem_to_hbm [thread:$0]  %s1123, 2048, %s3, [#allocation4], 128, 128, 8
    $region29: #{tpu_custom_call.1} parent=1 // pred_fallthru
      _
    // Predicated region
    $region30: #{tpu_custom_call.1} parent=1 // pred_check
      _
    $region31: #{tpu_custom_call.1} parent=1 // pred_check_branch
      %1130 = sbr.rel (0) target = $region33
    $region32: #{tpu_custom_call.1} parent=1 // pred_region
      %s1132 = ssub.s32 4096, 4096
      %1133 = vsyncadd [#allocation10], %s1132
      %s1134 = sshll.u32 [#allocation9], 4
      %s1135 = int_to_ptr.vmem [resolvable:$true] %s1134
      %1140 = dma.vmem_to_hbm [thread:$0]  %s1135, 4096, %s4, [#allocation10], 256, 256, 16
    $region33: #{tpu_custom_call.1} parent=1 // pred_fallthru
      _
    // Predicated region
    $region34: #{tpu_custom_call.1} parent=1 // pred_check
      _
    $region35: #{tpu_custom_call.1} parent=1 // pred_check_branch
      %1142 = sbr.rel (0) target = $region37
    $region36: #{tpu_custom_call.1} parent=1 // pred_region
      %1143 = dma.done [#allocation4], 2048
    $region37: #{tpu_custom_call.1} parent=1 // pred_fallthru
      _
    // Predicated region
    $region38: #{tpu_custom_call.1} parent=1 // pred_check
      _
    $region39: #{tpu_custom_call.1} parent=1 // pred_check_branch
      %1145 = sbr.rel (0) target = $region41
    $region40: #{tpu_custom_call.1} parent=1 // pred_region
      %1146 = dma.done [#allocation10], 4096
    $region41: #{tpu_custom_call.1} parent=1 // pred_fallthru
      _
    %1147 = vsyncpa [#allocation3], 1
    %1148 = vsyncpa [#allocation6], 1
    %1149 = vsyncpa [#allocation4], 1
    %1150 = vsyncpa [#allocation10], 1

</llo_original>
